<compile_context>
chip_gen: v5e
topology: v5e:2x2
jax: 0.10.0
libtpu: 0.0.40
codegen_flags: <defaults>
</compile_context>

<pallas_src>
import jax
import jax.numpy as jnp
from jax import lax
from jax.experimental import pallas as pl
from jax.experimental.pallas import tpu as pltpu


def _round_up(x, m):
    return (x + m - 1) // m * m


def _make_mlp_kernel(chunk, n_chunks):
    """MLP kernel over one (tbr, R*F) batch tile, processed in sub-chunks."""

    def kernel(x_ref, w1_ref, b1_ref, w2_ref, b2_ref, o_ref):
        # Weights / biases are tiny and VMEM-resident (index_map -> (0, 0));
        # load them per-chunk from VMEM (cheap) to keep vreg live ranges short.
        def compute(xc):
            h = jnp.dot(xc, w1_ref[...], preferred_element_type=jnp.float32)
            h = jnp.maximum(h + b1_ref[...], 0.0)                 # bias + ReLU (VPU)
            o = jnp.dot(h, w2_ref[...], preferred_element_type=jnp.float32)
            return o + b2_ref[...]

        if n_chunks == 1:
            o_ref[...] = compute(x_ref[...]).astype(o_ref.dtype)
        else:
            def body(c, carry):
                i = pl.multiple_of(c * chunk, chunk)
                xc = x_ref[pl.ds(i, chunk), :]
                o_ref[pl.ds(i, chunk), :] = compute(xc).astype(o_ref.dtype)
                return carry

            lax.fori_loop(0, n_chunks, body, 0, unroll=True)

    return kernel


def epa_splitting_forward(x, w1, b1, w2, b2, *, tb=16384):
    """Forward pass of EPASplittingModel.

    x: (B, F) f32; w1: (F, H); b1: (H,); w2: (H, C=2); b2: (C,).
    Weights are stored as (in_features, out_features), i.e. PyTorch W.T.
    `tb` is the batch tile size in ORIGINAL rows.
    """
    B, F = x.shape
    H = w1.shape[1]
    C = w2.shape[1]
    out_dtype = x.dtype

    # Lane-fold factor: pack R consecutive batch rows into the lane dim so the
    # feature axis becomes 128-lane dense (R * F == 128 for F == 16).
    if F < 128 and 128 % F == 0 and B % (128 // F) == 0:
        R = 128 // F
    else:
        R = 1                       # generic fallback (still correct)
    Bf = B // R
    Ff, Hf, Cf = R * F, R * H, R * C

    # Free row-major reshape: no extra HBM pass over x.
    xf = x.reshape(Bf, Ff)

    # Tiny block-diagonal weights / tiled biases (negligible prep cost).
    eye = jnp.eye(R, dtype=jnp.float32)
    w1f = jnp.kron(eye, w1.astype(jnp.float32))                   # (Ff, Hf)
    w2f = jnp.kron(eye, w2.astype(jnp.float32))                   # (Hf, Cf)
    b1f = jnp.tile(b1.astype(jnp.float32), R).reshape(1, Hf)
    b2f = jnp.tile(b2.astype(jnp.float32), R).reshape(1, Cf)

    # Batch tile in folded rows; processed in CHUNK-row pieces in-kernel.
    CHUNK = 256
    tbr = min(max(tb // R, 8), _round_up(Bf, 8))
    tbr = _round_up(tbr, 8)
    if tbr > CHUNK:
        tbr = _round_up(tbr, CHUNK)
        chunk = CHUNK
    else:
        chunk = tbr
    n_chunks = tbr // chunk

    grid = (pl.cdiv(Bf, tbr),)      # ragged tail handled by Pallas writeback

    outf = pl.pallas_call(
        _make_mlp_kernel(chunk, n_chunks),
        out_shape=jax.ShapeDtypeStruct((Bf, Cf), jnp.float32),
        grid=grid,
        in_specs=[
            pl.BlockSpec((tbr, Ff), lambda i: (i, 0)),   # x: streamed per tile
            pl.BlockSpec((Ff, Hf), lambda i: (0, 0)),    # w1 (block-diag): resident
            pl.BlockSpec((1, Hf), lambda i: (0, 0)),     # b1: resident
            pl.BlockSpec((Hf, Cf), lambda i: (0, 0)),    # w2 (block-diag): resident
            pl.BlockSpec((1, Cf), lambda i: (0, 0)),     # b2: resident
        ],
        out_specs=pl.BlockSpec((tbr, Cf), lambda i: (i, 0)),
        compiler_params=pltpu.CompilerParams(
            dimension_semantics=("parallel",),           # megacore split on v7x
            vmem_limit_bytes=32 * 1024 * 1024,
        ),
    )(xf, w1f, b1f, w2f, b2f)

    return outf.reshape(B, C).astype(out_dtype)


def reference_forward(x, w1, b1, w2, b2):
    # Plain f32 reference matching the PyTorch module.
    h = jnp.dot(x, w1, precision=lax.Precision.HIGHEST) + b1
    h = jnp.maximum(h, 0.0)
    return jnp.dot(h, w2, precision=lax.Precision.HIGHEST) + b2


if __name__ == "__main__":
    # Shapes consistent with the module: num_features=16, hidden=32, logits=2.
    B, F, H, C = 256, 16, 32, 2

    key = jax.random.PRNGKey(0)
    kx, kw1, kb1, kw2, kb2, kx2 = jax.random.split(key, 6)

    x = jax.random.normal(kx, (B, F), dtype=jnp.float32)

    # PyTorch-style uniform(-1/sqrt(fan_in), +1/sqrt(fan_in)) init.
    lim1 = 1.0 / jnp.sqrt(jnp.float32(F))
    lim2 = 1.0 / jnp.sqrt(jnp.float32(H))
    w1 = jax.random.uniform(kw1, (F, H), jnp.float32, -lim1, lim1)
    b1 = jax.random.uniform(kb1, (H,), jnp.float32, -lim1, lim1)
    w2 = jax.random.uniform(kw2, (H, C), jnp.float32, -lim2, lim2)
    b2 = jax.random.uniform(kb2, (C,), jnp.float32, -lim2, lim2)

    # Case 1: lane-folded path (B % 8 == 0); small tile => 4-step grid.
    out = jax.block_until_ready(epa_splitting_forward(x, w1, b1, w2, b2, tb=64))
    ref = reference_forward(x, w1, b1, w2, b2)
    assert out.shape == (B, C), out.shape
    assert jnp.allclose(out, ref, atol=2e-3, rtol=2e-3), "mismatch (folded path)"

    # Case 2: unfolded fallback + ragged cdiv grid (B not a multiple of 8/tile).
    B2 = 100
    x2 = jax.random.normal(kx2, (B2, F), dtype=jnp.float32)
    out2 = jax.block_until_ready(epa_splitting_forward(x2, w1, b1, w2, b2, tb=64))
    ref2 = reference_forward(x2, w1, b1, w2, b2)
    assert out2.shape == (B2, C), out2.shape
    assert jnp.allclose(out2, ref2, atol=2e-3, rtol=2e-3), "mismatch (ragged path)"

    print("KERNEL_OK")
</pallas_src>

<mosaic_0001>
module attributes {stable_mosaic.version = 11 : i64} {
  func.func @kernel(%arg0: i32, %arg1: memref<8x128xf32, #tpu.memory_space<vmem>>, %arg2: memref<128x256xf32, #tpu.memory_space<vmem>>, %arg3: memref<1x256xf32, #tpu.memory_space<vmem>>, %arg4: memref<256x16xf32, #tpu.memory_space<vmem>>, %arg5: memref<1x16xf32, #tpu.memory_space<vmem>>, %arg6: memref<8x16xf32, #tpu.memory_space<vmem>>) attributes {dimension_semantics = [#tpu.dimension_semantics<parallel>], iteration_bounds = array<i64: 4>, scalar_prefetch = 0 : i64, scratch_operands = 0 : i64, tpu.core_type = #tpu.core_type<tc>, window_params = [{transform_indices = @transform_0, window_bounds = array<i64: 8, 128>}, {pipeline_mode = #tpu.pipeline_mode<synchronous>, transform_indices = @transform_1, window_bounds = array<i64: 128, 256>}, {pipeline_mode = #tpu.pipeline_mode<synchronous>, transform_indices = @transform_2, window_bounds = array<i64: 1, 256>}, {pipeline_mode = #tpu.pipeline_mode<synchronous>, transform_indices = @transform_3, window_bounds = array<i64: 256, 16>}, {pipeline_mode = #tpu.pipeline_mode<synchronous>, transform_indices = @transform_4, window_bounds = array<i64: 1, 16>}, {transform_indices = @transform_5, window_bounds = array<i64: 8, 16>}]} {
    %c0 = arith.constant 0 : index
    %c0_0 = arith.constant 0 : index
    %0 = vector.load %arg1[%c0, %c0_0] : memref<8x128xf32, #tpu.memory_space<vmem>>, vector<8x128xf32>
    %c0_1 = arith.constant 0 : index
    %c0_2 = arith.constant 0 : index
    %1 = vector.load %arg2[%c0_1, %c0_2] : memref<128x256xf32, #tpu.memory_space<vmem>>, vector<128x256xf32>
    %cst = arith.constant dense<0.000000e+00> : vector<8x256xf32>
    %2 = tpu.matmul %0, %1, %cst {dimension_numbers = #tpu.dot_dimension_numbers<[1], [0], [0], [1], [0, 0, 1, 1], [], []>} : vector<8x128xf32>, vector<128x256xf32>, vector<8x256xf32> -> vector<8x256xf32>
    %c0_3 = arith.constant 0 : index
    %c0_4 = arith.constant 0 : index
    %3 = vector.load %arg3[%c0_3, %c0_4] : memref<1x256xf32, #tpu.memory_space<vmem>>, vector<1x256xf32>
    %4 = vector.broadcast %3 : vector<1x256xf32> to vector<8x256xf32>
    %5 = arith.addf %2, %4 : vector<8x256xf32>
    %cst_5 = arith.constant 0.000000e+00 : f32
    %6 = vector.broadcast %cst_5 : f32 to vector<8x256xf32>
    %7 = arith.maximumf %5, %6 : vector<8x256xf32>
    %c0_6 = arith.constant 0 : index
    %c0_7 = arith.constant 0 : index
    %8 = vector.load %arg4[%c0_6, %c0_7] : memref<256x16xf32, #tpu.memory_space<vmem>>, vector<256x16xf32>
    %cst_8 = arith.constant dense<0.000000e+00> : vector<8x16xf32>
    %9 = tpu.matmul %7, %8, %cst_8 {dimension_numbers = #tpu.dot_dimension_numbers<[1], [0], [0], [1], [0, 0, 1, 1], [], []>} : vector<8x256xf32>, vector<256x16xf32>, vector<8x16xf32> -> vector<8x16xf32>
    %c0_9 = arith.constant 0 : index
    %c0_10 = arith.constant 0 : index
    %10 = vector.load %arg5[%c0_9, %c0_10] : memref<1x16xf32, #tpu.memory_space<vmem>>, vector<1x16xf32>
    %11 = vector.broadcast %10 : vector<1x16xf32> to vector<8x16xf32>
    %12 = arith.addf %9, %11 : vector<8x16xf32>
    %c0_11 = arith.constant 0 : index
    %c0_12 = arith.constant 0 : index
    %13 = vector.load %arg6[%c0_11, %c0_12] : memref<8x16xf32, #tpu.memory_space<vmem>>, vector<8x16xf32>
    tpu.vector_store %arg6[%c0_11, %c0_12], %12 {strides = array<i32>} : memref<8x16xf32, #tpu.memory_space<vmem>>, vector<8x16xf32>,
    return
  }
  func.func @transform_0(%arg0: i32) -> (i32, i32) {
    %c0_i32 = arith.constant 0 : i32
    %c0_i32_0 = arith.constant 0 : i32
    return %arg0, %c0_i32 : i32, i32
  }
  func.func @transform_1(%arg0: i32) -> (i32, i32) {
    %c0_i32 = arith.constant 0 : i32
    %c0_i32_0 = arith.constant 0 : i32
    %c0_i32_1 = arith.constant 0 : i32
    return %c0_i32, %c0_i32_0 : i32, i32
  }
  func.func @transform_2(%arg0: i32) -> (i32, i32) {
    %c0_i32 = arith.constant 0 : i32
    %c0_i32_0 = arith.constant 0 : i32
    %c0_i32_1 = arith.constant 0 : i32
    return %c0_i32, %c0_i32_0 : i32, i32
  }
  func.func @transform_3(%arg0: i32) -> (i32, i32) {
    %c0_i32 = arith.constant 0 : i32
    %c0_i32_0 = arith.constant 0 : i32
    %c0_i32_1 = arith.constant 0 : i32
    return %c0_i32, %c0_i32_0 : i32, i32
  }
  func.func @transform_4(%arg0: i32) -> (i32, i32) {
    %c0_i32 = arith.constant 0 : i32
    %c0_i32_0 = arith.constant 0 : i32
    %c0_i32_1 = arith.constant 0 : i32
    return %c0_i32, %c0_i32_0 : i32, i32
  }
  func.func @transform_5(%arg0: i32) -> (i32, i32) {
    %c0_i32 = arith.constant 0 : i32
    %c0_i32_0 = arith.constant 0 : i32
    return %arg0, %c0_i32 : i32, i32
  }
}

</mosaic_0001>

<llo_original>
// kernel: tpu_custom_call.1
$region0: #{tpu_custom_call.1}
  #allocation0 [shape = 'u32[]', space=smem, size = 0x4, offset = 0x4, fixed_abs, tag = 'smem constant byte address 0x4 - core index']
  #allocation1 [shape = 'u32[72,128]{1,0:T(1,128)}', space=vmem, size = 0x9000, scoped, tag = 'internal scratch']
  %s0 = inlined_call_operand.vmem [shape: f32[32,128], index: 0, kind: input, shape index: {}]
  %s1 = inlined_call_operand.vmem [shape: f32[128,256], index: 1, kind: input, shape index: {}]
  %s2 = inlined_call_operand.hbm [shape: f32[1,256], index: 2, kind: input, shape index: {}]
  %s3 = inlined_call_operand.vmem [shape: f32[256,16], index: 3, kind: input, shape index: {}]
  %s4 = inlined_call_operand.vmem [shape: f32[1,16], index: 4, kind: input, shape index: {}]
  %s5 = inlined_call_operand.vmem [shape: f32[32,16], index: 5, kind: output, shape index: {}]
  %s6 = sld [smem:[#allocation0]]
  $region57: #{tpu_custom_call.1} parent=0
    _
  %s8 = ssub.s32 1, %s6
  %s9 = scalar_select 0, %s8, %s6
  $region1: #{tpu_custom_call.1} parent=0
    #allocation2 [shape = 'u8[1024]{0}', space=vmem, size = 0x400, scoped, tag = 'input window, operand 2, single buffered']
    #allocation3 [shape = 's32[2]{0}', space=sflag, size = 0x8, scoped, tag = 'scoped memory for tpu_custom_call.1']
    %10 = vsyncpa [#allocation3], 0
    loop: start=0, step=1, limit=6
    $region2: #{tpu_custom_call.1} parent=1 // loop_pre_header
      _
    $region3: #{tpu_custom_call.1} parent=1 // loop_header
      %s12 = sphi 0, %s16
      %p13 = scmp.ge.s32.totalorder %s12, 6
      %s22 = sphi 0, %s24
      %s25 = sphi 0, %s22
      %s26 = sphi 0, %s25
      %s42 = sphi 0, %s26
      %s46 = sphi 0, %s46
      %s48 = sphi 0, %s46
      %s49 = sphi 0, %s48
      %s63 = sphi 0, %s49
      %s67 = sphi 0, %s67
      %s69 = sphi 0, %s67
      %s70 = sphi 0, %s69
      %s84 = sphi 0, %s70
      %s88 = sphi 0, %s88
      %s90 = sphi 0, %s88
      %s91 = sphi 0, %s90
      %s105 = sphi 0, %s91
      %s109 = sphi 0, %s109
      %s111 = sphi 0, %s109
      %s112 = sphi 0, %s111
      %s126 = sphi 0, %s112
      %s132 = sphi 0, %s134
      %s135 = sphi 0, %s132
      %s136 = sphi 0, %s135
      %s152 = sphi 0, %s136
    $region4: #{tpu_custom_call.1} parent=1 // loop_header_branch
      %15 = sbr.rel (%p13) target = $region8
    $region5: #{tpu_custom_call.1} parent=1 // loop_body
      %s17 = ssub.s32 %s12, 1
      %s18 = ssub.s32 %s12, 2
      %s19 = sadd.s32 %s12, 1
      %s20 = ssub.s32 %s12, %s19
      %p21 = scmp.eq.s32.totalorder %s20, 0
      %s23 = sadd.s32 %s22, 1
      %s24 = scalar_select %p21, %s22, %s23
      %p27 = pneg %p21
      %p28 = scmp.eq.s32.totalorder %s12, 3
      %p29 = por %p27, %p28
      %p30 = scmp.ne.s32.totalorder %s22, %s25
      %p31 = scmp.eq.s32.totalorder %s12, 0
      %p32 = por %p30, %p31
      %p33 = scmp.ne.s32.totalorder %s22, %s25
      %p34 = scmp.eq.s32.totalorder %s17, 3
      %p35 = por %p33, %p34
      %p36 = scmp.ne.s32.totalorder %s25, %s26
      %p37 = scmp.eq.s32.totalorder %s17, 0
      %p38 = por %p36, %p37
      %p39 = scmp.ne.s32.totalorder %s25, %s26
      %p40 = scmp.eq.s32.totalorder %s18, 3
      %p41 = por %p39, %p40
      %p43 = scmp.ne.s32.totalorder %s26, %s42
      %p44 = scmp.eq.s32.totalorder %s18, 0
      %p45 = por %p43, %p44
      %s47 = sadd.s32 %s46, 1
      %p50 = scmp.eq.s32.totalorder %s12, 3
      %p51 = scmp.ne.s32.totalorder %s46, %s48
      %p52 = scmp.eq.s32.totalorder %s12, 0
      %p53 = por %p51, %p52
      %p54 = scmp.ne.s32.totalorder %s46, %s48
      %p55 = scmp.eq.s32.totalorder %s17, 3
      %p56 = por %p54, %p55
      %p57 = scmp.ne.s32.totalorder %s48, %s49
      %p58 = scmp.eq.s32.totalorder %s17, 0
      %p59 = por %p57, %p58
      %p60 = scmp.ne.s32.totalorder %s48, %s49
      %p61 = scmp.eq.s32.totalorder %s18, 3
      %p62 = por %p60, %p61
      %p64 = scmp.ne.s32.totalorder %s49, %s63
      %p65 = scmp.eq.s32.totalorder %s18, 0
      %p66 = por %p64, %p65
      %s68 = sadd.s32 %s67, 1
      %p71 = scmp.eq.s32.totalorder %s12, 3
      %p72 = scmp.ne.s32.totalorder %s67, %s69
      %p73 = scmp.eq.s32.totalorder %s12, 0
      %p74 = por %p72, %p73
      %p75 = scmp.ne.s32.totalorder %s67, %s69
      %p76 = scmp.eq.s32.totalorder %s17, 3
      %p77 = por %p75, %p76
      %p78 = scmp.ne.s32.totalorder %s69, %s70
      %p79 = scmp.eq.s32.totalorder %s17, 0
      %p80 = por %p78, %p79
      %p81 = scmp.ne.s32.totalorder %s69, %s70
      %p82 = scmp.eq.s32.totalorder %s18, 3
      %p83 = por %p81, %p82
      %p85 = scmp.ne.s32.totalorder %s70, %s84
      %p86 = scmp.eq.s32.totalorder %s18, 0
      %p87 = por %p85, %p86
      %s89 = sadd.s32 %s88, 1
      %p92 = scmp.eq.s32.totalorder %s12, 3
      %p93 = scmp.ne.s32.totalorder %s88, %s90
      %p94 = scmp.eq.s32.totalorder %s12, 0
      %p95 = por %p93, %p94
      %p96 = scmp.ne.s32.totalorder %s88, %s90
      %p97 = scmp.eq.s32.totalorder %s17, 3
      %p98 = por %p96, %p97
      %p99 = scmp.ne.s32.totalorder %s90, %s91
      %p100 = scmp.eq.s32.totalorder %s17, 0
      %p101 = por %p99, %p100
      %p102 = scmp.ne.s32.totalorder %s90, %s91
      %p103 = scmp.eq.s32.totalorder %s18, 3
      %p104 = por %p102, %p103
      %p106 = scmp.ne.s32.totalorder %s91, %s105
      %p107 = scmp.eq.s32.totalorder %s18, 0
      %p108 = por %p106, %p107
      %s110 = sadd.s32 %s109, 1
      %p113 = scmp.eq.s32.totalorder %s12, 3
      %p114 = scmp.ne.s32.totalorder %s109, %s111
      %p115 = scmp.eq.s32.totalorder %s12, 0
      %p116 = por %p114, %p115
      %p117 = scmp.ne.s32.totalorder %s109, %s111
      %p118 = scmp.eq.s32.totalorder %s17, 3
      %p119 = por %p117, %p118
      %p120 = scmp.ne.s32.totalorder %s111, %s112
      %p121 = scmp.eq.s32.totalorder %s17, 0
      %p122 = por %p120, %p121
      %p123 = scmp.ne.s32.totalorder %s111, %s112
      %p124 = scmp.eq.s32.totalorder %s18, 3
      %p125 = por %p123, %p124
      %p127 = scmp.ne.s32.totalorder %s112, %s126
      %p128 = scmp.eq.s32.totalorder %s18, 0
      %p129 = por %p127, %p128
      %s130 = ssub.s32 %s12, %s19
      %p131 = scmp.eq.s32.totalorder %s130, 0
      %s133 = sadd.s32 %s132, 1
      %s134 = scalar_select %p131, %s132, %s133
      %p137 = pneg %p131
      %p138 = scmp.eq.s32.totalorder %s12, 3
      %p139 = por %p137, %p138
      %p140 = scmp.ne.s32.totalorder %s132, %s135
      %p141 = scmp.eq.s32.totalorder %s12, 0
      %p142 = por %p140, %p141
      %p143 = scmp.ne.s32.totalorder %s132, %s135
      %p144 = scmp.eq.s32.totalorder %s17, 3
      %p145 = por %p143, %p144
      %p146 = scmp.ne.s32.totalorder %s135, %s136
      %p147 = scmp.eq.s32.totalorder %s17, 0
      %p148 = por %p146, %p147
      %p149 = scmp.ne.s32.totalorder %s135, %s136
      %p150 = scmp.eq.s32.totalorder %s18, 3
      %p151 = por %p149, %p150
      %p153 = scmp.ne.s32.totalorder %s136, %s152
      %p154 = scmp.eq.s32.totalorder %s18, 0
      %p155 = por %p153, %p154
      %p156 = scmp.le.s32.totalorder 1, %s12
      %p157 = scmp.lt.s32.totalorder %s12, 5
      %p158 = pnand %p156, %p157
      %p159 = pneg %p158
      // Predicated region
      $region9: #{tpu_custom_call.1} parent=5 // pred_check
        _
      $region10: #{tpu_custom_call.1} parent=5 // pred_check_branch
        %161 = sbr.rel (%p158) target = $region12
      $region11: #{tpu_custom_call.1} parent=5 // pred_region
        %s162 = ssub.s32 %s12, 1
        // Predicated region
        $region13: #{tpu_custom_call.1} parent=11 // pred_check
          %p163 = pneg %p59
        $region14: #{tpu_custom_call.1} parent=11 // pred_check_branch
          %165 = sbr.rel (%p163) target = $region16
        $region15: #{tpu_custom_call.1} parent=11 // pred_region
          _
        $region16: #{tpu_custom_call.1} parent=11 // pred_fallthru
          _
        // Predicated region
        $region17: #{tpu_custom_call.1} parent=11 // pred_check
          %p166 = pneg %p80
        $region18: #{tpu_custom_call.1} parent=11 // pred_check_branch
          %168 = sbr.rel (%p166) target = $region20
        $region19: #{tpu_custom_call.1} parent=11 // pred_region
          %170 = vsyncadd [#allocation3], 0
          %s172 = sshll.u32 %s2, 4
          %s173 = int_to_ptr.hbm [resolvable:$true] %s172
          %s174 = sshll.u32 [#allocation2], 4
          %s175 = int_to_ptr.vmem [resolvable:$true] %s174
          %177 = dma.hbm_to_vmem [thread:$0]  %s173, 32, %s175, [#allocation3]
        $region20: #{tpu_custom_call.1} parent=11 // pred_fallthru
          _
        // Predicated region
        $region21: #{tpu_custom_call.1} parent=11 // pred_check
          %p178 = pneg %p101
        $region22: #{tpu_custom_call.1} parent=11 // pred_check_branch
          %180 = sbr.rel (%p178) target = $region24
        $region23: #{tpu_custom_call.1} parent=11 // pred_region
          _
        $region24: #{tpu_custom_call.1} parent=11 // pred_fallthru
          _
        // Predicated region
        $region25: #{tpu_custom_call.1} parent=11 // pred_check
          %p181 = pneg %p122
        $region26: #{tpu_custom_call.1} parent=11 // pred_check_branch
          %183 = sbr.rel (%p181) target = $region28
        $region27: #{tpu_custom_call.1} parent=11 // pred_region
          _
        $region28: #{tpu_custom_call.1} parent=11 // pred_fallthru
          _
      $region12: #{tpu_custom_call.1} parent=5 // pred_fallthru
        _
      %p184 = scmp.lt.s32.totalorder %s12, 4
      // Predicated region
      $region29: #{tpu_custom_call.1} parent=5 // pred_check
        %p185 = pneg %p184
      $region30: #{tpu_custom_call.1} parent=5 // pred_check_branch
        %187 = sbr.rel (%p185) target = $region32
      $region31: #{tpu_custom_call.1} parent=5 // pred_region
        // Predicated region
        $region33: #{tpu_custom_call.1} parent=31 // pred_check
          %p188 = pneg %p32
        $region34: #{tpu_custom_call.1} parent=31 // pred_check_branch
          %190 = sbr.rel (%p188) target = $region36
        $region35: #{tpu_custom_call.1} parent=31 // pred_region
          %p191 = scmp.lt.s32.totalorder %s12, 3
          %s192 = scalar_select %p191, %s12, 3
          %s193 = smul.addr %s192, 8
          %s194 = scalar_lea.vmem %s0, %s193
        $region36: #{tpu_custom_call.1} parent=31 // pred_fallthru
          _
      $region32: #{tpu_custom_call.1} parent=5 // pred_fallthru
        _
      %p195 = scmp.le.s32.totalorder 1, %s12
      %p196 = scmp.lt.s32.totalorder %s12, 5
      %p197 = pnand %p195, %p196
      %p198 = pneg %p197
      // Predicated region
      $region37: #{tpu_custom_call.1} parent=5 // pred_check
        _
      $region38: #{tpu_custom_call.1} parent=5 // pred_check_branch
        %200 = sbr.rel (%p197) target = $region40
      $region39: #{tpu_custom_call.1} parent=5 // pred_region
        %s201 = ssub.s32 %s12, 1
        // Predicated region
        $region41: #{tpu_custom_call.1} parent=39 // pred_check
          %p202 = pneg %p80
        $region42: #{tpu_custom_call.1} parent=39 // pred_check_branch
          %204 = sbr.rel (%p202) target = $region44
        $region43: #{tpu_custom_call.1} parent=39 // pred_region
          %206 = dma.done [#allocation3], 32
        $region44: #{tpu_custom_call.1} parent=39 // pred_fallthru
          _
        %p207 = scmp.lt.s32.totalorder %s17, 3
        %s208 = scalar_select %p207, %s17, 3
        %s209 = smul.addr %s208, 8
        %s210 = scalar_lea.vmem %s0, %s209
        %p211 = pneg %p38
        %p212 = pneg %p35
        %p213 = pneg %p59
        %p214 = pneg %p56
        %p215 = pneg %p80
        %p216 = pneg %p77
        %p217 = pneg %p101
        %p218 = pneg %p98
        %p219 = pneg %p122
        %p220 = pneg %p119
        %p221 = pneg %p148
        %p222 = pneg %p145
        %p223 = scmp.lt.s32.totalorder %s17, 3
        %s224 = scalar_select %p223, %s17, 3
        %s225 = smul.addr %s224, 8
        %s226 = scalar_lea.vmem %s5, %s225
        %p227 = scmp.lt.s32.totalorder %s17, 3
        %s228 = scalar_select %p227, %s17, 3
        %s229 = smul.addr %s228, 8
        %s230 = scalar_lea.vmem %s0, %s229
        %p231 = scmp.lt.s32.totalorder %s17, 3
        %s232 = scalar_select %p231, %s17, 3
        %s233 = smul.addr %s232, 8
        %s234 = scalar_lea.vmem %s5, %s233
        %v235 = vld [vmem:[%s230] sm:$0xff]
        %v236 = vld [vmem:[%s1] sm:$0xff]
        %v237 = vld [vmem:[%s1 + $0x8] sm:$0xff]
        %v238 = vld [vmem:[%s1 + $0x10] sm:$0xff]
        %v239 = vld [vmem:[%s1 + $0x18] sm:$0xff]
        %v240 = vld [vmem:[%s1 + $0x20] sm:$0xff]
        %v241 = vld [vmem:[%s1 + $0x28] sm:$0xff]
        %v242 = vld [vmem:[%s1 + $0x30] sm:$0xff]
        %v243 = vld [vmem:[%s1 + $0x38] sm:$0xff]
        %v244 = vld [vmem:[%s1 + $0x40] sm:$0xff]
        %v245 = vld [vmem:[%s1 + $0x48] sm:$0xff]
        %v246 = vld [vmem:[%s1 + $0x50] sm:$0xff]
        %v247 = vld [vmem:[%s1 + $0x58] sm:$0xff]
        %v248 = vld [vmem:[%s1 + $0x60] sm:$0xff]
        %v249 = vld [vmem:[%s1 + $0x68] sm:$0xff]
        %v250 = vld [vmem:[%s1 + $0x70] sm:$0xff]
        %v251 = vld [vmem:[%s1 + $0x78] sm:$0xff]
        %v252 = vld [vmem:[%s1 + $0x80] sm:$0xff]
        %v253 = vld [vmem:[%s1 + $0x88] sm:$0xff]
        %v254 = vld [vmem:[%s1 + $0x90] sm:$0xff]
        %v255 = vld [vmem:[%s1 + $0x98] sm:$0xff]
        %v256 = vld [vmem:[%s1 + $0xa0] sm:$0xff]
        %v257 = vld [vmem:[%s1 + $0xa8] sm:$0xff]
        %v258 = vld [vmem:[%s1 + $0xb0] sm:$0xff]
        %v259 = vld [vmem:[%s1 + $0xb8] sm:$0xff]
        %v260 = vld [vmem:[%s1 + $0xc0] sm:$0xff]
        %v261 = vld [vmem:[%s1 + $0xc8] sm:$0xff]
        %v262 = vld [vmem:[%s1 + $0xd0] sm:$0xff]
        %v263 = vld [vmem:[%s1 + $0xd8] sm:$0xff]
        %v264 = vld [vmem:[%s1 + $0xe0] sm:$0xff]
        %v265 = vld [vmem:[%s1 + $0xe8] sm:$0xff]
        %v266 = vld [vmem:[%s1 + $0xf0] sm:$0xff]
        %v267 = vld [vmem:[%s1 + $0xf8] sm:$0xff]
        %v268 = vld [vmem:[#allocation2] sm:$0x3]
        %v270 = vperm.slane %v268, 0
        %v271 = vperm.slane %v268, 1
        %274 = vmatpush.msra.mxu0 %v266
        %275 = vmatpush.msra.mxu0 %v264
        %276 = vmatpush.msra.mxu0 %v262
        %277 = vmatpush.msra.mxu0 %v260
        %278 = vmatpush.msra.mxu0 %v258
        %279 = vmatpush.msra.mxu0 %v256
        %280 = vmatpush.msra.mxu0 %v254
        %281 = vmatpush.msra.mxu0 %v252
        %282 = vmatpush.msra.mxu0 %v250
        %283 = vmatpush.msra.mxu0 %v248
        %284 = vmatpush.msra.mxu0 %v246
        %285 = vmatpush.msra.mxu0 %v244
        %286 = vmatpush.msra.mxu0 %v242
        %287 = vmatpush.msra.mxu0 %v240
        %288 = vmatpush.msra.mxu0 %v238
        %289 = vmatpush.msra.mxu0 %v236
        %290 = vmatmul.f32.gmra.mxu0 %v235
        %v291 = vpop.f32.mrf.mxu0
        %v292 = vadd.f32 %v270, %v291
        %293 = vdwg.mxu0
        %294 = vmatpush.msra.mxu0 %v267
        %295 = vmatpush.msra.mxu0 %v265
        %296 = vmatpush.msra.mxu0 %v263
        %297 = vmatpush.msra.mxu0 %v261
        %298 = vmatpush.msra.mxu0 %v259
        %299 = vmatpush.msra.mxu0 %v257
        %300 = vmatpush.msra.mxu0 %v255
        %301 = vmatpush.msra.mxu0 %v253
        %302 = vmatpush.msra.mxu0 %v251
        %303 = vmatpush.msra.mxu0 %v249
        %304 = vmatpush.msra.mxu0 %v247
        %305 = vmatpush.msra.mxu0 %v245
        %306 = vmatpush.msra.mxu0 %v243
        %307 = vmatpush.msra.mxu0 %v241
        %308 = vmatpush.msra.mxu0 %v239
        %309 = vmatpush.msra.mxu0 %v237
        %310 = vmatmul.f32.gmra.mxu0 %v235
        %v311 = vpop.f32.mrf.mxu0
        %v312 = vadd.f32 %v271, %v311
        %313 = vdwg.mxu0
        %v314 = vmax.f32 %v292, 0.0
        %v315 = vmax.f32 %v312, 0.0
        %v316 = vld [vmem:[%s3] sm:$0xff]
        %v317 = vld [vmem:[%s3 + $0x8] sm:$0xff]
        %v318 = vld [vmem:[%s3 + $0x10] sm:$0xff]
        %v319 = vld [vmem:[%s3 + $0x18] sm:$0xff]
        %v320 = vld [vmem:[%s3 + $0x20] sm:$0xff]
        %v321 = vld [vmem:[%s3 + $0x28] sm:$0xff]
        %v322 = vld [vmem:[%s3 + $0x30] sm:$0xff]
        %v323 = vld [vmem:[%s3 + $0x38] sm:$0xff]
        %v324 = vld [vmem:[%s3 + $0x40] sm:$0xff]
        %v325 = vld [vmem:[%s3 + $0x48] sm:$0xff]
        %v326 = vld [vmem:[%s3 + $0x50] sm:$0xff]
        %v327 = vld [vmem:[%s3 + $0x58] sm:$0xff]
        %v328 = vld [vmem:[%s3 + $0x60] sm:$0xff]
        %v329 = vld [vmem:[%s3 + $0x68] sm:$0xff]
        %v330 = vld [vmem:[%s3 + $0x70] sm:$0xff]
        %v331 = vld [vmem:[%s3 + $0x78] sm:$0xff]
        %v332 = vld [vmem:[%s3 + $0x80] sm:$0xff]
        %v333 = vld [vmem:[%s3 + $0x88] sm:$0xff]
        %v334 = vld [vmem:[%s3 + $0x90] sm:$0xff]
        %v335 = vld [vmem:[%s3 + $0x98] sm:$0xff]
        %v336 = vld [vmem:[%s3 + $0xa0] sm:$0xff]
        %v337 = vld [vmem:[%s3 + $0xa8] sm:$0xff]
        %v338 = vld [vmem:[%s3 + $0xb0] sm:$0xff]
        %v339 = vld [vmem:[%s3 + $0xb8] sm:$0xff]
        %v340 = vld [vmem:[%s3 + $0xc0] sm:$0xff]
        %v341 = vld [vmem:[%s3 + $0xc8] sm:$0xff]
        %v342 = vld [vmem:[%s3 + $0xd0] sm:$0xff]
        %v343 = vld [vmem:[%s3 + $0xd8] sm:$0xff]
        %v344 = vld [vmem:[%s3 + $0xe0] sm:$0xff]
        %v345 = vld [vmem:[%s3 + $0xe8] sm:$0xff]
        %v346 = vld [vmem:[%s3 + $0xf0] sm:$0xff]
        %v347 = vld [vmem:[%s3 + $0xf8] sm:$0xff]
        %v348 = vld [vmem:[%s4] sm:$0x1]
        %v350 = vperm.slane %v348, 0
        %352 = vmatpush.msra.mxu0 %v331
        %353 = vmatpush.msra.mxu0 %v330
        %354 = vmatpush.msra.mxu0 %v329
        %355 = vmatpush.msra.mxu0 %v328
        %356 = vmatpush.msra.mxu0 %v327
        %357 = vmatpush.msra.mxu0 %v326
        %358 = vmatpush.msra.mxu0 %v325
        %359 = vmatpush.msra.mxu0 %v324
        %360 = vmatpush.msra.mxu0 %v323
        %361 = vmatpush.msra.mxu0 %v322
        %362 = vmatpush.msra.mxu0 %v321
        %363 = vmatpush.msra.mxu0 %v320
        %364 = vmatpush.msra.mxu0 %v319
        %365 = vmatpush.msra.mxu0 %v318
        %366 = vmatpush.msra.mxu0 %v317
        %367 = vmatpush.msra.mxu0 %v316
        %368 = vmatmul.f32.gmra.mxu0 %v314
        %v369 = vpop.f32.mrf.mxu0
        %v370 = vadd.f32 %v350, %v369
        %371 = vdwg.mxu0
        %372 = vmatpush.msra.mxu0 %v347
        %373 = vmatpush.msra.mxu0 %v346
        %374 = vmatpush.msra.mxu0 %v345
        %375 = vmatpush.msra.mxu0 %v344
        %376 = vmatpush.msra.mxu0 %v343
        %377 = vmatpush.msra.mxu0 %v342
        %378 = vmatpush.msra.mxu0 %v341
        %379 = vmatpush.msra.mxu0 %v340
        %380 = vmatpush.msra.mxu0 %v339
        %381 = vmatpush.msra.mxu0 %v338
        %382 = vmatpush.msra.mxu0 %v337
        %383 = vmatpush.msra.mxu0 %v336
        %384 = vmatpush.msra.mxu0 %v335
        %385 = vmatpush.msra.mxu0 %v334
        %386 = vmatpush.msra.mxu0 %v333
        %387 = vmatpush.msra.mxu0 %v332
        %388 = vmatmul.f32.gmra.mxu0 %v315
        %v389 = vpop.f32.mrf.mxu0
        %v390 = vadd.f32 %v370, %v389
        %391 = vdwg.mxu0
        %vm392 = vcmask 130048
        %393 = vst.msk [vmem:[%s234] sm:$0xff] %vm392, %v390
        %p394 = scmp.lt.s32.totalorder %s17, 3
        %s395 = scalar_select %p394, %s17, 3
        %s396 = smul.addr %s395, 8
        %s397 = scalar_lea.vmem %s5, %s396
        // Predicated region
        $region45: #{tpu_custom_call.1} parent=39 // pred_check
          %p398 = pneg %p145
        $region46: #{tpu_custom_call.1} parent=39 // pred_check_branch
          %400 = sbr.rel (%p398) target = $region48
        $region47: #{tpu_custom_call.1} parent=39 // pred_region
          _
        $region48: #{tpu_custom_call.1} parent=39 // pred_fallthru
          _
      $region40: #{tpu_custom_call.1} parent=5 // pred_fallthru
        _
      %p401 = scmp.le.s32.totalorder 2, %s12
      // Predicated region
      $region49: #{tpu_custom_call.1} parent=5 // pred_check
        %p402 = pneg %p401
      $region50: #{tpu_custom_call.1} parent=5 // pred_check_branch
        %404 = sbr.rel (%p402) target = $region52
      $region51: #{tpu_custom_call.1} parent=5 // pred_region
        %s405 = ssub.s32 %s12, 2
        // Predicated region
        $region53: #{tpu_custom_call.1} parent=51 // pred_check
          %p406 = pneg %p151
        $region54: #{tpu_custom_call.1} parent=51 // pred_check_branch
          %408 = sbr.rel (%p406) target = $region56
        $region55: #{tpu_custom_call.1} parent=51 // pred_region
          %p409 = scmp.lt.s32.totalorder %s18, 3
          %s410 = scalar_select %p409, %s18, 3
          %s411 = smul.addr %s410, 8
          %s412 = scalar_lea.vmem %s5, %s411
        $region56: #{tpu_custom_call.1} parent=51 // pred_fallthru
          _
      $region52: #{tpu_custom_call.1} parent=5 // pred_fallthru
        _
    $region6: #{tpu_custom_call.1} parent=1 // loop_footer
      %s16 = sadd.s32 1, %s12
    $region7: #{tpu_custom_call.1} parent=1 // loop_footer_branch
      %11 = sbr.rel target = $region3
    $region8: #{tpu_custom_call.1} parent=1 // loop_exit
      _
    %413 = vsyncpa [#allocation3], 1
    %s414 = scalar_lea.sflag [#allocation3], 1
    %415 = vsyncpa %s414, 1

</llo_original>
